<compile_context>
chip_gen: v5e
topology: v5e:2x2
jax: 0.10.0
libtpu: 0.0.40
codegen_flags: <defaults>
</compile_context>

<pallas_src>
import functools

import jax
import jax.numpy as jnp
from jax.experimental import pallas as pl
from jax.experimental.pallas import tpu as pltpu

_BN_EPS = 1e-5
_VMEM_LIMIT = 32 * 1024 * 1024  # explicit, safe on v5e / v6e / v7x


def _channel_mix(w, x):
    """(C_out, C_in) @ (C_in, T) -> (C_out, T) in f32.

    For tiny channel counts the MXU pads K and N to 128/256 (<1% utilization),
    so do the mix as C_in broadcast FMAs on the VPU; use the MXU only when the
    channel count is large enough to matter.
    """
    c_out, c_in = w.shape
    if c_in <= 16:
        acc = w[:, 0:1] * x[0:1, :]
        for k in range(1, c_in):
            acc = acc + w[:, k:k + 1] * x[k:k + 1, :]
        return acc
    return jnp.dot(w, x, preferred_element_type=jnp.float32)


def _stats_kernel(x_ref, w_ref, g_ref, bt_ref, scale_ref, shift_ref,
                  sum_acc, sq_acc, *, m_total, eps):
    # x_ref:  (C_in, T) lane-dense tile      w_ref: (C_out, C_in)
    # g_ref/bt_ref: (C_out, 1) BN gamma/beta
    # scale_ref/shift_ref: (C_out, 1) fused BN affine (written on last step)
    first = jnp.logical_and(pl.program_id(0) == 0, pl.program_id(1) == 0)
    last = jnp.logical_and(pl.program_id(0) == pl.num_programs(0) - 1,
                           pl.program_id(1) == pl.num_programs(1) - 1)

    @pl.when(first)
    def _():
        sum_acc[...] = jnp.zeros_like(sum_acc)
        sq_acc[...] = jnp.zeros_like(sq_acc)

    x = x_ref[...].astype(jnp.float32)
    w = w_ref[...].astype(jnp.float32)
    z = _channel_mix(w, x)                                  # (C_out, T)
    sum_acc[...] += jnp.sum(z, axis=1, keepdims=True)       # lane reduce (XLU)
    sq_acc[...] += jnp.sum(z * z, axis=1, keepdims=True)

    @pl.when(last)
    def _():
        inv_m = 1.0 / m_total
        mean = sum_acc[...] * inv_m
        var = jnp.maximum(sq_acc[...] * inv_m - mean * mean, 0.0)
        scale = g_ref[...] * jax.lax.rsqrt(var + eps)
        scale_ref[...] = scale
        shift_ref[...] = bt_ref[...] - mean * scale


def _apply_kernel(x_ref, w_ref, scale_ref, shift_ref, o_ref):
    x = x_ref[...].astype(jnp.float32)
    w = w_ref[...].astype(jnp.float32)
    z = _channel_mix(w, x)                                  # (C_out, T)
    out = jnp.maximum(z * scale_ref[...] + shift_ref[...], 0.0)
    o_ref[...] = out.astype(o_ref.dtype)


def _pick_spatial_tile(hw, c, max_block_bytes=2 << 20):
    """Largest lane tile (multiple of 128) dividing hw, under a VMEM budget."""
    if hw % 128 != 0:
        return hw  # odd spatial extent: one whole row per block
    cap = max(128, (max_block_bytes // (4 * max(c, 1))) // 128 * 128)
    t = min(hw, cap)
    while hw % t != 0:
        t -= 128
    return t


def fc_forward(x_nchw, conv_w, conv_b, bn_gamma, bn_beta, *, eps=_BN_EPS):
    """Pallas implementation of FC.forward (training-mode BN; dropout unused)."""
    del conv_b  # exactly cancelled by training-mode BatchNorm (see header note)
    N, C_in, H, W = x_nchw.shape
    C_out = conv_w.shape[0]
    assert conv_w.shape[1] == C_in, "conv weight does not match input channels"
    HW = H * W

    T = _pick_spatial_tile(HW, max(C_in, C_out))
    grid = (N, HW // T)

    x3 = x_nchw.reshape(N, C_in, HW)                      # pure view, no transpose
    w2 = conv_w.reshape(C_out, C_in).astype(jnp.float32)
    g2 = bn_gamma.reshape(C_out, 1).astype(jnp.float32)
    b2 = bn_beta.reshape(C_out, 1).astype(jnp.float32)

    x_spec = pl.BlockSpec((None, C_in, T), lambda n, t: (n, 0, t))
    w_spec = pl.BlockSpec((C_out, C_in), lambda n, t: (0, 0))
    vec_spec = pl.BlockSpec((C_out, 1), lambda n, t: (0, 0))

    # Pass 1: per-channel batch statistics -> fused BN scale/shift.
    scale, shift = pl.pallas_call(
        functools.partial(_stats_kernel, m_total=float(N * HW), eps=float(eps)),
        out_shape=(jax.ShapeDtypeStruct((C_out, 1), jnp.float32),
                   jax.ShapeDtypeStruct((C_out, 1), jnp.float32)),
        grid_spec=pltpu.PrefetchScalarGridSpec(
            num_scalar_prefetch=0,
            grid=grid,
            in_specs=[x_spec, w_spec, vec_spec, vec_spec],
            out_specs=[vec_spec, vec_spec],
            scratch_shapes=[pltpu.VMEM((C_out, 1), jnp.float32),
                            pltpu.VMEM((C_out, 1), jnp.float32)],
        ),
        compiler_params=pltpu.CompilerParams(
            dimension_semantics=("arbitrary", "arbitrary"),
            vmem_limit_bytes=_VMEM_LIMIT),
    )(x3, w2, g2, b2)

    # Pass 2: conv + fused BN affine + ReLU, fully parallel over (N, HW tiles).
    out3 = pl.pallas_call(
        _apply_kernel,
        out_shape=jax.ShapeDtypeStruct((N, C_out, HW), x_nchw.dtype),
        grid_spec=pltpu.PrefetchScalarGridSpec(
            num_scalar_prefetch=0,
            grid=grid,
            in_specs=[x_spec, w_spec, vec_spec, vec_spec],
            out_specs=pl.BlockSpec((None, C_out, T), lambda n, t: (n, 0, t)),
        ),
        compiler_params=pltpu.CompilerParams(
            dimension_semantics=("parallel", "parallel"),
            vmem_limit_bytes=_VMEM_LIMIT),
    )(x3, w2, scale, shift)

    return out3.reshape(N, C_out, H, W)


def _reference(x_nchw, conv_w, conv_b, bn_gamma, bn_beta):
    """Pure-JAX reference matching PyTorch training-mode forward."""
    C_out, C_in = conv_w.shape[0], conv_w.shape[1]
    w2 = conv_w.reshape(C_out, C_in)
    y = jnp.einsum("nchw,oc->nohw", x_nchw, w2) + conv_b[None, :, None, None]
    mean = jnp.mean(y, axis=(0, 2, 3), keepdims=True)
    var = jnp.mean((y - mean) ** 2, axis=(0, 2, 3), keepdims=True)
    y_norm = (y - mean) / jnp.sqrt(var + _BN_EPS)
    out = bn_gamma[None, :, None, None] * y_norm + bn_beta[None, :, None, None]
    return jnp.maximum(out, 0.0)


if __name__ == "__main__":
    key = jax.random.PRNGKey(0)
    k_x, k_w, k_b = jax.random.split(key, 3)

    # Small shapes consistent with the module: batch=2, dims=4, spatial=16x16
    N, C, H, W = 2, 4, 16, 16
    x = jax.random.normal(k_x, (N, C, H, W), dtype=jnp.float32)

    # Conv2d(dims, dims, 1) + BatchNorm2d(dims) parameters
    conv_w = jax.random.normal(k_w, (C, C, 1, 1), dtype=jnp.float32) * 0.5
    conv_b = jax.random.normal(k_b, (C,), dtype=jnp.float32) * 0.1
    bn_gamma = jnp.ones((C,), dtype=jnp.float32)   # BN init: weight = 1
    bn_beta = jnp.zeros((C,), dtype=jnp.float32)   # BN init: bias = 0

    out = fc_forward(x, conv_w, conv_b, bn_gamma, bn_beta)
    out = jax.block_until_ready(out)

    ref = _reference(x, conv_w, conv_b, bn_gamma, bn_beta)
    assert out.shape == (N, C, H, W)
    assert jnp.allclose(out, ref, atol=1e-4, rtol=1e-4), "mismatch vs reference"

    print("KERNEL_OK")
</pallas_src>

<mosaic_0001>
module attributes {stable_mosaic.version = 11 : i64} {
  func.func @_stats_kernel(%arg0: i32, %arg1: i32, %arg2: memref<1x4x256xf32, #tpu.memory_space<vmem>>, %arg3: memref<4x4xf32, #tpu.memory_space<vmem>>, %arg4: memref<4x1xf32, #tpu.memory_space<vmem>>, %arg5: memref<4x1xf32, #tpu.memory_space<vmem>>, %arg6: memref<4x1xf32, #tpu.memory_space<vmem>>, %arg7: memref<4x1xf32, #tpu.memory_space<vmem>>, %arg8: memref<4x1xf32, #tpu.memory_space<vmem>>, %arg9: memref<4x1xf32, #tpu.memory_space<vmem>>) attributes {dimension_semantics = [#tpu.dimension_semantics<arbitrary>, #tpu.dimension_semantics<arbitrary>], iteration_bounds = array<i64: 2, 1>, scalar_prefetch = 0 : i64, scratch_operands = 2 : i64, tpu.core_type = #tpu.core_type<tc>, window_params = [{transform_indices = @transform_0, window_bounds = array<i64: 1, 4, 256>}, {pipeline_mode = #tpu.pipeline_mode<synchronous>, transform_indices = @transform_1, window_bounds = array<i64: 4, 4>}, {pipeline_mode = #tpu.pipeline_mode<synchronous>, transform_indices = @transform_2, window_bounds = array<i64: 4, 1>}, {pipeline_mode = #tpu.pipeline_mode<synchronous>, transform_indices = @transform_3, window_bounds = array<i64: 4, 1>}, {pipeline_mode = #tpu.pipeline_mode<synchronous>, transform_indices = @transform_4, window_bounds = array<i64: 4, 1>}, {pipeline_mode = #tpu.pipeline_mode<synchronous>, transform_indices = @transform_5, window_bounds = array<i64: 4, 1>}]} {
    %c0_i32 = arith.constant 0 : i32
    %0 = arith.cmpi eq, %arg0, %c0_i32 : i32
    %c0_i32_0 = arith.constant 0 : i32
    %1 = arith.cmpi eq, %arg1, %c0_i32_0 : i32
    %2 = arith.andi %0, %1 : i1
    %c1_i32 = arith.constant 1 : i32
    %3 = arith.cmpi eq, %arg0, %c1_i32 : i32
    %c0_i32_1 = arith.constant 0 : i32
    %4 = arith.cmpi eq, %arg1, %c0_i32_1 : i32
    %5 = arith.andi %3, %4 : i1
    %6 = arith.extui %2 : i1 to i32
    %c0_i32_2 = arith.constant 0 : i32
    %7 = arith.cmpi ne, %6, %c0_i32_2 : i32
    scf.if %7 {
      %cst_17 = arith.constant 0.000000e+00 : f32
      %47 = vector.broadcast %cst_17 : f32 to vector<4x1xf32>
      %c0_18 = arith.constant 0 : index
      %c0_19 = arith.constant 0 : index
      %48 = vector.load %arg8[%c0_18, %c0_19] : memref<4x1xf32, #tpu.memory_space<vmem>>, vector<4x1xf32>
      tpu.vector_store %arg8[%c0_18, %c0_19], %47 {strides = array<i32>} : memref<4x1xf32, #tpu.memory_space<vmem>>, vector<4x1xf32>,
      %cst_20 = arith.constant 0.000000e+00 : f32
      %49 = vector.broadcast %cst_20 : f32 to vector<4x1xf32>
      %c0_21 = arith.constant 0 : index
      %c0_22 = arith.constant 0 : index
      %50 = vector.load %arg9[%c0_21, %c0_22] : memref<4x1xf32, #tpu.memory_space<vmem>>, vector<4x1xf32>
      tpu.vector_store %arg9[%c0_21, %c0_22], %49 {strides = array<i32>} : memref<4x1xf32, #tpu.memory_space<vmem>>, vector<4x1xf32>,
    } else {
    }
    %c0 = arith.constant 0 : index
    %c0_3 = arith.constant 0 : index
    %c0_4 = arith.constant 0 : index
    %8 = vector.load %arg2[%c0, %c0_3, %c0_4] : memref<1x4x256xf32, #tpu.memory_space<vmem>>, vector<1x4x256xf32>
    %9 = vector.shape_cast %8 : vector<1x4x256xf32> to vector<4x256xf32>
    %c0_5 = arith.constant 0 : index
    %c0_6 = arith.constant 0 : index
    %10 = vector.load %arg3[%c0_5, %c0_6] : memref<4x4xf32, #tpu.memory_space<vmem>>, vector<4x4xf32>
    %11 = vector.extract_strided_slice %10 {offsets = [0, 0], sizes = [4, 1], strides = [1, 1]} : vector<4x4xf32> to vector<4x1xf32>
    %12 = vector.extract_strided_slice %9 {offsets = [0, 0], sizes = [1, 256], strides = [1, 1]} : vector<4x256xf32> to vector<1x256xf32>
    %13 = vector.broadcast %11 : vector<4x1xf32> to vector<4x256xf32>
    %14 = vector.broadcast %12 : vector<1x256xf32> to vector<4x256xf32>
    %15 = arith.mulf %13, %14 : vector<4x256xf32>
    %16 = vector.extract_strided_slice %10 {offsets = [0, 1], sizes = [4, 1], strides = [1, 1]} : vector<4x4xf32> to vector<4x1xf32>
    %17 = vector.extract_strided_slice %9 {offsets = [1, 0], sizes = [1, 256], strides = [1, 1]} : vector<4x256xf32> to vector<1x256xf32>
    %18 = vector.broadcast %16 : vector<4x1xf32> to vector<4x256xf32>
    %19 = vector.broadcast %17 : vector<1x256xf32> to vector<4x256xf32>
    %20 = arith.mulf %18, %19 : vector<4x256xf32>
    %21 = arith.addf %15, %20 : vector<4x256xf32>
    %22 = vector.extract_strided_slice %10 {offsets = [0, 2], sizes = [4, 1], strides = [1, 1]} : vector<4x4xf32> to vector<4x1xf32>
    %23 = vector.extract_strided_slice %9 {offsets = [2, 0], sizes = [1, 256], strides = [1, 1]} : vector<4x256xf32> to vector<1x256xf32>
    %24 = vector.broadcast %22 : vector<4x1xf32> to vector<4x256xf32>
    %25 = vector.broadcast %23 : vector<1x256xf32> to vector<4x256xf32>
    %26 = arith.mulf %24, %25 : vector<4x256xf32>
    %27 = arith.addf %21, %26 : vector<4x256xf32>
    %28 = vector.extract_strided_slice %10 {offsets = [0, 3], sizes = [4, 1], strides = [1, 1]} : vector<4x4xf32> to vector<4x1xf32>
    %29 = vector.extract_strided_slice %9 {offsets = [3, 0], sizes = [1, 256], strides = [1, 1]} : vector<4x256xf32> to vector<1x256xf32>
    %30 = vector.broadcast %28 : vector<4x1xf32> to vector<4x256xf32>
    %31 = vector.broadcast %29 : vector<1x256xf32> to vector<4x256xf32>
    %32 = arith.mulf %30, %31 : vector<4x256xf32>
    %33 = arith.addf %27, %32 : vector<4x256xf32>
    %c0_7 = arith.constant 0 : index
    %c0_8 = arith.constant 0 : index
    %34 = vector.load %arg8[%c0_7, %c0_8] : memref<4x1xf32, #tpu.memory_space<vmem>>, vector<4x1xf32>
    %cst = arith.constant dense<0.000000e+00> : vector<4xf32>
    %35 = vector.multi_reduction <add>, %33, %cst [1] : vector<4x256xf32> to vector<4xf32>
    %36 = vector.shape_cast %35 : vector<4xf32> to vector<4x1xf32>
    %37 = arith.addf %34, %36 : vector<4x1xf32>
    %c0_9 = arith.constant 0 : index
    %c0_10 = arith.constant 0 : index
    %38 = vector.load %arg8[%c0_9, %c0_10] : memref<4x1xf32, #tpu.memory_space<vmem>>, vector<4x1xf32>
    tpu.vector_store %arg8[%c0_9, %c0_10], %37 {strides = array<i32>} : memref<4x1xf32, #tpu.memory_space<vmem>>, vector<4x1xf32>,
    %c0_11 = arith.constant 0 : index
    %c0_12 = arith.constant 0 : index
    %39 = vector.load %arg9[%c0_11, %c0_12] : memref<4x1xf32, #tpu.memory_space<vmem>>, vector<4x1xf32>
    %40 = arith.mulf %33, %33 : vector<4x256xf32>
    %cst_13 = arith.constant dense<0.000000e+00> : vector<4xf32>
    %41 = vector.multi_reduction <add>, %40, %cst_13 [1] : vector<4x256xf32> to vector<4xf32>
    %42 = vector.shape_cast %41 : vector<4xf32> to vector<4x1xf32>
    %43 = arith.addf %39, %42 : vector<4x1xf32>
    %c0_14 = arith.constant 0 : index
    %c0_15 = arith.constant 0 : index
    %44 = vector.load %arg9[%c0_14, %c0_15] : memref<4x1xf32, #tpu.memory_space<vmem>>, vector<4x1xf32>
    tpu.vector_store %arg9[%c0_14, %c0_15], %43 {strides = array<i32>} : memref<4x1xf32, #tpu.memory_space<vmem>>, vector<4x1xf32>,
    %45 = arith.extui %5 : i1 to i32
    %c0_i32_16 = arith.constant 0 : i32
    %46 = arith.cmpi ne, %45, %c0_i32_16 : i32
    scf.if %46 {
      %c0_17 = arith.constant 0 : index
      %c0_18 = arith.constant 0 : index
      %47 = vector.load %arg8[%c0_17, %c0_18] : memref<4x1xf32, #tpu.memory_space<vmem>>, vector<4x1xf32>
      %cst_19 = arith.constant 0.001953125 : f32
      %48 = vector.broadcast %cst_19 : f32 to vector<4x1xf32>
      %49 = arith.mulf %47, %48 : vector<4x1xf32>
      %c0_20 = arith.constant 0 : index
      %c0_21 = arith.constant 0 : index
      %50 = vector.load %arg9[%c0_20, %c0_21] : memref<4x1xf32, #tpu.memory_space<vmem>>, vector<4x1xf32>
      %cst_22 = arith.constant 0.001953125 : f32
      %51 = vector.broadcast %cst_22 : f32 to vector<4x1xf32>
      %52 = arith.mulf %50, %51 : vector<4x1xf32>
      %53 = arith.mulf %49, %49 : vector<4x1xf32>
      %54 = arith.subf %52, %53 : vector<4x1xf32>
      %cst_23 = arith.constant 0.000000e+00 : f32
      %55 = vector.broadcast %cst_23 : f32 to vector<4x1xf32>
      %56 = arith.maximumf %54, %55 : vector<4x1xf32>
      %c0_24 = arith.constant 0 : index
      %c0_25 = arith.constant 0 : index
      %57 = vector.load %arg4[%c0_24, %c0_25] : memref<4x1xf32, #tpu.memory_space<vmem>>, vector<4x1xf32>
      %cst_26 = arith.constant 9.99999974E-6 : f32
      %58 = vector.broadcast %cst_26 : f32 to vector<4x1xf32>
      %59 = arith.addf %56, %58 : vector<4x1xf32>
      %60 = math.rsqrt %59 : vector<4x1xf32>
      %61 = arith.mulf %57, %60 : vector<4x1xf32>
      %c0_27 = arith.constant 0 : index
      %c0_28 = arith.constant 0 : index
      %62 = vector.load %arg6[%c0_27, %c0_28] : memref<4x1xf32, #tpu.memory_space<vmem>>, vector<4x1xf32>
      tpu.vector_store %arg6[%c0_27, %c0_28], %61 {strides = array<i32>} : memref<4x1xf32, #tpu.memory_space<vmem>>, vector<4x1xf32>,
      %c0_29 = arith.constant 0 : index
      %c0_30 = arith.constant 0 : index
      %63 = vector.load %arg5[%c0_29, %c0_30] : memref<4x1xf32, #tpu.memory_space<vmem>>, vector<4x1xf32>
      %64 = arith.mulf %49, %61 : vector<4x1xf32>
      %65 = arith.subf %63, %64 : vector<4x1xf32>
      %c0_31 = arith.constant 0 : index
      %c0_32 = arith.constant 0 : index
      %66 = vector.load %arg7[%c0_31, %c0_32] : memref<4x1xf32, #tpu.memory_space<vmem>>, vector<4x1xf32>
      tpu.vector_store %arg7[%c0_31, %c0_32], %65 {strides = array<i32>} : memref<4x1xf32, #tpu.memory_space<vmem>>, vector<4x1xf32>,
    } else {
    }
    return
  }
  func.func @transform_0(%arg0: i32, %arg1: i32) -> (i32, i32, i32) {
    %c0_i32 = arith.constant 0 : i32
    %c0_i32_0 = arith.constant 0 : i32
    return %arg0, %c0_i32, %arg1 : i32, i32, i32
  }
  func.func @transform_1(%arg0: i32, %arg1: i32) -> (i32, i32) {
    %c0_i32 = arith.constant 0 : i32
    %c0_i32_0 = arith.constant 0 : i32
    %c0_i32_1 = arith.constant 0 : i32
    return %c0_i32, %c0_i32_0 : i32, i32
  }
  func.func @transform_2(%arg0: i32, %arg1: i32) -> (i32, i32) {
    %c0_i32 = arith.constant 0 : i32
    %c0_i32_0 = arith.constant 0 : i32
    %c0_i32_1 = arith.constant 0 : i32
    return %c0_i32, %c0_i32_0 : i32, i32
  }
  func.func @transform_3(%arg0: i32, %arg1: i32) -> (i32, i32) {
    %c0_i32 = arith.constant 0 : i32
    %c0_i32_0 = arith.constant 0 : i32
    %c0_i32_1 = arith.constant 0 : i32
    return %c0_i32, %c0_i32_0 : i32, i32
  }
  func.func @transform_4(%arg0: i32, %arg1: i32) -> (i32, i32) {
    %c0_i32 = arith.constant 0 : i32
    %c0_i32_0 = arith.constant 0 : i32
    %c0_i32_1 = arith.constant 0 : i32
    return %c0_i32, %c0_i32_0 : i32, i32
  }
  func.func @transform_5(%arg0: i32, %arg1: i32) -> (i32, i32) {
    %c0_i32 = arith.constant 0 : i32
    %c0_i32_0 = arith.constant 0 : i32
    %c0_i32_1 = arith.constant 0 : i32
    return %c0_i32, %c0_i32_0 : i32, i32
  }
}

</mosaic_0001>

<llo_original>
// kernel: tpu_custom_call.1
$region0: #{tpu_custom_call.1}
  #allocation0 [shape = 'u32[]', space=smem, size = 0x4, offset = 0x4, fixed_abs, tag = 'smem constant byte address 0x4 - core index']
  #allocation1 [shape = 'u32[72,128]{1,0:T(1,128)}', space=vmem, size = 0x9000, scoped, tag = 'internal scratch']
  #allocation2 [shape = 'f32[4,1]{1,0:T(4,128)}', space=vmem, size = 0x800, scoped, tag = 'scratch operand']
  #allocation3 [shape = 'f32[4,1]{1,0:T(4,128)}', space=vmem, size = 0x800, scoped, tag = 'scratch operand']
  %s0 = inlined_call_operand.hbm [shape: f32[2,4,256], index: 0, kind: input, shape index: {}]
  %s1 = inlined_call_operand.vmem [shape: f32[4,4], index: 1, kind: input, shape index: {}]
  %s2 = inlined_call_operand.vmem [shape: f32[4,1], index: 2, kind: input, shape index: {}]
  %s3 = inlined_call_operand.vmem [shape: f32[4,1], index: 3, kind: input, shape index: {}]
  %s4 = inlined_call_operand.vmem [shape: f32[4,1], index: 4, kind: output, shape index: {0}]
  %s5 = inlined_call_operand.vmem [shape: f32[4,1], index: 5, kind: output, shape index: {1}]
  %6 = xla_tuple %s4, %s5
  %s7 = sld [smem:[#allocation0]]
  $region69: #{tpu_custom_call.1} parent=0
    _
  %s9 = ssub.s32 1, %s7
  %s10 = scalar_select 0, %s9, %s7
  $region1: #{tpu_custom_call.1} parent=0
    #allocation4 [shape = 'u8[8192]{0}', space=vmem, size = 0x2000, scoped, tag = 'input window, operand 0']
    #allocation5 [shape = 's32[2]{0}', space=sflag, size = 0x8, scoped, tag = 'scoped memory for tpu_custom_call.1']
    %11 = vsyncpa [#allocation5], 0
    %s12 = scalar_lea.sflag [#allocation5], 1
    %13 = vsyncpa %s12, 0
    loop: start=0, step=1, limit=4
    $region2: #{tpu_custom_call.1} parent=1 // loop_pre_header
      _
    $region3: #{tpu_custom_call.1} parent=1 // loop_header
      %s15 = sphi 0, %s19
      %p16 = scmp.ge.s32.totalorder %s15, 4
      %s22 = sphi 0, %s34
      %s23 = sphi 0, %s30
      %s24 = sphi 0, %s22
      %s25 = sphi 0, %s23
      %s26 = sphi 0, %s24
      %s27 = sphi 0, %s25
      %s39 = sphi 0, %s41
      %s42 = sphi 0, %s39
      %s43 = sphi 0, %s42
      %s59 = sphi 0, %s43
      %s63 = sphi 0, %s63
      %s65 = sphi 0, %s63
      %s66 = sphi 0, %s65
      %s80 = sphi 0, %s66
      %s84 = sphi 0, %s84
      %s86 = sphi 0, %s84
      %s87 = sphi 0, %s86
      %s101 = sphi 0, %s87
      %s105 = sphi 0, %s105
      %s107 = sphi 0, %s105
      %s108 = sphi 0, %s107
      %s122 = sphi 0, %s108
      %s126 = sphi 0, %s126
      %s128 = sphi 0, %s126
      %s129 = sphi 0, %s128
      %s143 = sphi 0, %s129
      %s147 = sphi 0, %s147
      %s149 = sphi 0, %s147
      %s150 = sphi 0, %s149
      %s164 = sphi 0, %s150
    $region4: #{tpu_custom_call.1} parent=1 // loop_header_branch
      %18 = sbr.rel (%p16) target = $region8
    $region5: #{tpu_custom_call.1} parent=1 // loop_body
      %s20 = ssub.s32 %s15, 1
      %s21 = ssub.s32 %s15, 2
      %s28 = sadd.s32 1, %s23
      %p29 = scmp.ge.s32.totalorder %s28, 1
      %s30 = scalar_select %p29, 0, %s28
      %s31 = sadd.s32 1, %s22
      %s32 = scalar_select %p29, %s31, %s22
      %p33 = scmp.ge.s32.totalorder %s32, 2
      %s34 = scalar_select %p33, 0, %s32
      %s35 = ssub.s32 %s22, %s34
      %s36 = ssub.s32 %s23, %s30
      %s37 = sor.u32 %s35, %s36
      %p38 = scmp.eq.s32.totalorder %s37, 0
      %s40 = sadd.s32 %s39, 1
      %s41 = scalar_select %p38, %s39, %s40
      %p44 = pneg %p38
      %p45 = scmp.eq.s32.totalorder %s15, 1
      %p46 = por %p44, %p45
      %p47 = scmp.ne.s32.totalorder %s39, %s42
      %p48 = scmp.eq.s32.totalorder %s15, 0
      %p49 = por %p47, %p48
      %p50 = scmp.ne.s32.totalorder %s39, %s42
      %p51 = scmp.eq.s32.totalorder %s20, 1
      %p52 = por %p50, %p51
      %p53 = scmp.ne.s32.totalorder %s42, %s43
      %p54 = scmp.eq.s32.totalorder %s20, 0
      %p55 = por %p53, %p54
      %p56 = scmp.ne.s32.totalorder %s42, %s43
      %p57 = scmp.eq.s32.totalorder %s21, 1
      %p58 = por %p56, %p57
      %p60 = scmp.ne.s32.totalorder %s43, %s59
      %p61 = scmp.eq.s32.totalorder %s21, 0
      %p62 = por %p60, %p61
      %s64 = sadd.s32 %s63, 1
      %p67 = scmp.eq.s32.totalorder %s15, 1
      %p68 = scmp.ne.s32.totalorder %s63, %s65
      %p69 = scmp.eq.s32.totalorder %s15, 0
      %p70 = por %p68, %p69
      %p71 = scmp.ne.s32.totalorder %s63, %s65
      %p72 = scmp.eq.s32.totalorder %s20, 1
      %p73 = por %p71, %p72
      %p74 = scmp.ne.s32.totalorder %s65, %s66
      %p75 = scmp.eq.s32.totalorder %s20, 0
      %p76 = por %p74, %p75
      %p77 = scmp.ne.s32.totalorder %s65, %s66
      %p78 = scmp.eq.s32.totalorder %s21, 1
      %p79 = por %p77, %p78
      %p81 = scmp.ne.s32.totalorder %s66, %s80
      %p82 = scmp.eq.s32.totalorder %s21, 0
      %p83 = por %p81, %p82
      %s85 = sadd.s32 %s84, 1
      %p88 = scmp.eq.s32.totalorder %s15, 1
      %p89 = scmp.ne.s32.totalorder %s84, %s86
      %p90 = scmp.eq.s32.totalorder %s15, 0
      %p91 = por %p89, %p90
      %p92 = scmp.ne.s32.totalorder %s84, %s86
      %p93 = scmp.eq.s32.totalorder %s20, 1
      %p94 = por %p92, %p93
      %p95 = scmp.ne.s32.totalorder %s86, %s87
      %p96 = scmp.eq.s32.totalorder %s20, 0
      %p97 = por %p95, %p96
      %p98 = scmp.ne.s32.totalorder %s86, %s87
      %p99 = scmp.eq.s32.totalorder %s21, 1
      %p100 = por %p98, %p99
      %p102 = scmp.ne.s32.totalorder %s87, %s101
      %p103 = scmp.eq.s32.totalorder %s21, 0
      %p104 = por %p102, %p103
      %s106 = sadd.s32 %s105, 1
      %p109 = scmp.eq.s32.totalorder %s15, 1
      %p110 = scmp.ne.s32.totalorder %s105, %s107
      %p111 = scmp.eq.s32.totalorder %s15, 0
      %p112 = por %p110, %p111
      %p113 = scmp.ne.s32.totalorder %s105, %s107
      %p114 = scmp.eq.s32.totalorder %s20, 1
      %p115 = por %p113, %p114
      %p116 = scmp.ne.s32.totalorder %s107, %s108
      %p117 = scmp.eq.s32.totalorder %s20, 0
      %p118 = por %p116, %p117
      %p119 = scmp.ne.s32.totalorder %s107, %s108
      %p120 = scmp.eq.s32.totalorder %s21, 1
      %p121 = por %p119, %p120
      %p123 = scmp.ne.s32.totalorder %s108, %s122
      %p124 = scmp.eq.s32.totalorder %s21, 0
      %p125 = por %p123, %p124
      %s127 = sadd.s32 %s126, 1
      %p130 = scmp.eq.s32.totalorder %s15, 1
      %p131 = scmp.ne.s32.totalorder %s126, %s128
      %p132 = scmp.eq.s32.totalorder %s15, 0
      %p133 = por %p131, %p132
      %p134 = scmp.ne.s32.totalorder %s126, %s128
      %p135 = scmp.eq.s32.totalorder %s20, 1
      %p136 = por %p134, %p135
      %p137 = scmp.ne.s32.totalorder %s128, %s129
      %p138 = scmp.eq.s32.totalorder %s20, 0
      %p139 = por %p137, %p138
      %p140 = scmp.ne.s32.totalorder %s128, %s129
      %p141 = scmp.eq.s32.totalorder %s21, 1
      %p142 = por %p140, %p141
      %p144 = scmp.ne.s32.totalorder %s129, %s143
      %p145 = scmp.eq.s32.totalorder %s21, 0
      %p146 = por %p144, %p145
      %s148 = sadd.s32 %s147, 1
      %p151 = scmp.eq.s32.totalorder %s15, 1
      %p152 = scmp.ne.s32.totalorder %s147, %s149
      %p153 = scmp.eq.s32.totalorder %s15, 0
      %p154 = por %p152, %p153
      %p155 = scmp.ne.s32.totalorder %s147, %s149
      %p156 = scmp.eq.s32.totalorder %s20, 1
      %p157 = por %p155, %p156
      %p158 = scmp.ne.s32.totalorder %s149, %s150
      %p159 = scmp.eq.s32.totalorder %s20, 0
      %p160 = por %p158, %p159
      %p161 = scmp.ne.s32.totalorder %s149, %s150
      %p162 = scmp.eq.s32.totalorder %s21, 1
      %p163 = por %p161, %p162
      %p165 = scmp.ne.s32.totalorder %s150, %s164
      %p166 = scmp.eq.s32.totalorder %s21, 0
      %p167 = por %p165, %p166
      %p168 = scmp.le.s32.totalorder 1, %s15
      %p169 = scmp.lt.s32.totalorder %s15, 3
      %p170 = pnand %p168, %p169
      %p171 = pneg %p170
      // Predicated region
      $region9: #{tpu_custom_call.1} parent=5 // pred_check
        _
      $region10: #{tpu_custom_call.1} parent=5 // pred_check_branch
        %173 = sbr.rel (%p170) target = $region12
      $region11: #{tpu_custom_call.1} parent=5 // pred_region
        %s174 = ssub.s32 %s15, 1
        // Predicated region
        $region13: #{tpu_custom_call.1} parent=11 // pred_check
          %p175 = pneg %p76
        $region14: #{tpu_custom_call.1} parent=11 // pred_check_branch
          %177 = sbr.rel (%p175) target = $region16
        $region15: #{tpu_custom_call.1} parent=11 // pred_region
          _
        $region16: #{tpu_custom_call.1} parent=11 // pred_fallthru
          _
        // Predicated region
        $region17: #{tpu_custom_call.1} parent=11 // pred_check
          %p178 = pneg %p97
        $region18: #{tpu_custom_call.1} parent=11 // pred_check_branch
          %180 = sbr.rel (%p178) target = $region20
        $region19: #{tpu_custom_call.1} parent=11 // pred_region
          _
        $region20: #{tpu_custom_call.1} parent=11 // pred_fallthru
          _
        // Predicated region
        $region21: #{tpu_custom_call.1} parent=11 // pred_check
          %p181 = pneg %p118
        $region22: #{tpu_custom_call.1} parent=11 // pred_check_branch
          %183 = sbr.rel (%p181) target = $region24
        $region23: #{tpu_custom_call.1} parent=11 // pred_region
          _
        $region24: #{tpu_custom_call.1} parent=11 // pred_fallthru
          _
      $region12: #{tpu_custom_call.1} parent=5 // pred_fallthru
        _
      %p184 = scmp.lt.s32.totalorder %s15, 2
      // Predicated region
      $region25: #{tpu_custom_call.1} parent=5 // pred_check
        %p185 = pneg %p184
      $region26: #{tpu_custom_call.1} parent=5 // pred_check_branch
        %187 = sbr.rel (%p185) target = $region28
      $region27: #{tpu_custom_call.1} parent=5 // pred_region
        // Predicated region
        $region29: #{tpu_custom_call.1} parent=27 // pred_check
          %p188 = pneg %p49
        $region30: #{tpu_custom_call.1} parent=27 // pred_check_branch
          %190 = sbr.rel (%p188) target = $region32
        $region31: #{tpu_custom_call.1} parent=27 // pred_region
          %s191 = sand.u32 %s39, 1
          %s192 = scalar_lea.sflag [#allocation5], %s191
          %s193 = sand.u32 %s39, 1
          %s194 = smul.addr %s193, 8
          %s195 = scalar_lea.vmem [#allocation4], %s194
          %s196 = smul.u32 2, %s23
          %198 = vsyncadd %s192, 0
          %s199 = smul.addr %s22, 2
          %s200 = sadd.s32 %s196, %s199
          %s201 = smul.addr %s200, 4
          %s202 = scalar_lea.hbm %s0, %s201
          %s204 = sshll.u32 %s202, 4
          %s205 = int_to_ptr.hbm [resolvable:$true] %s204
          %s206 = sshll.u32 %s195, 4
          %s207 = int_to_ptr.vmem [resolvable:$true] %s206
          %209 = dma.hbm_to_vmem [thread:$0]  %s205, 128, %s207, %s192
        $region32: #{tpu_custom_call.1} parent=27 // pred_fallthru
          _
      $region28: #{tpu_custom_call.1} parent=5 // pred_fallthru
        _
      %p210 = scmp.le.s32.totalorder 1, %s15
      %p211 = scmp.lt.s32.totalorder %s15, 3
      %p212 = pnand %p210, %p211
      %p213 = pneg %p212
      // Predicated region
      $region33: #{tpu_custom_call.1} parent=5 // pred_check
        _
      $region34: #{tpu_custom_call.1} parent=5 // pred_check_branch
        %215 = sbr.rel (%p212) target = $region36
      $region35: #{tpu_custom_call.1} parent=5 // pred_region
        %s216 = ssub.s32 %s15, 1
        %s217 = sand.u32 %s42, 1
        %s218 = scalar_lea.sflag [#allocation5], %s217
        %s219 = sand.u32 %s42, 1
        %s220 = smul.addr %s219, 8
        %s221 = scalar_lea.vmem [#allocation4], %s220
        // Predicated region
        $region37: #{tpu_custom_call.1} parent=35 // pred_check
          %p222 = pneg %p55
        $region38: #{tpu_custom_call.1} parent=35 // pred_check_branch
          %224 = sbr.rel (%p222) target = $region40
        $region39: #{tpu_custom_call.1} parent=35 // pred_region
          %226 = dma.done %s218, 128
        $region40: #{tpu_custom_call.1} parent=35 // pred_fallthru
          _
        %s227 = sand.u32 %s42, 1
        %s228 = scalar_lea.sflag [#allocation5], %s227
        %s229 = sand.u32 %s42, 1
        %s230 = smul.addr %s229, 8
        %s231 = scalar_lea.vmem [#allocation4], %s230
        %p232 = pneg %p55
        %p233 = pneg %p52
        %p234 = pneg %p76
        %p235 = pneg %p73
        %p236 = pneg %p97
        %p237 = pneg %p94
        %p238 = pneg %p118
        %p239 = pneg %p115
        %p240 = pneg %p139
        %p241 = pneg %p136
        %p242 = pneg %p160
        %p243 = pneg %p157
        %s244 = smul.u32 2, %s25
        %p245 = scmp.eq.s32.totalorder %s24, 0
        %p246 = scmp.eq.s32.totalorder %s25, 0
        %p247 = pnand %p245, %p246
        %p248 = pneg %p247
        %p249 = scmp.eq.s32.totalorder %s24, 1
        %p250 = pnand %p249, %p246
        %p251 = pneg %p250
        // Predicated region
        $region41: #{tpu_custom_call.1} parent=35 // pred_check
          _
        $region42: #{tpu_custom_call.1} parent=35 // pred_check_branch
          %253 = sbr.rel (%p247) target = $region44
        $region43: #{tpu_custom_call.1} parent=35 // pred_region
          %vm254 = vcmask 3072
          %255 = vst.msk [vmem:[#allocation2] sm:$0xf] %vm254, 0.0
          %256 = vst.msk [vmem:[#allocation3] sm:$0xf] %vm254, 0.0
        $region44: #{tpu_custom_call.1} parent=35 // pred_fallthru
          _
        %v257 = vld [vmem:[%s221] sm:$0xff]
        %v258 = vld [vmem:[%s1] sm:$0xf]
        %260 = vset.pattern.permute.xlu0 0
        %261 = vperm.xlu0 %260, %v258
        %v262 = vpop.permute.xlu0 %261
        %v265 = vperm.slane %v257, 0
        %v266 = vperm.slane %v257, 4
        %v269 = vperm.slane %v265, 0
        %v270 = vperm.slane %v266, 0
        %v271 = vmul.f32 %v262, %v269
        %v272 = vmul.f32 %v262, %v270
        %273 = vset.pattern.permute.xlu0 1
        %274 = vperm.xlu0 %273, %v258
        %v275 = vpop.permute.xlu0 %274
        %v277 = vperm.slane %v257, 1
        %v278 = vperm.slane %v257, 5
        %v281 = vperm.slane %v277, 1
        %v282 = vperm.slane %v278, 1
        %v283 = vmul.f32 %v275, %v281
        %v284 = vmul.f32 %v275, %v282
        %v285 = vadd.f32 %v271, %v283
        %v286 = vadd.f32 %v272, %v284
        %287 = vset.pattern.permute.xlu0 2
        %288 = vperm.xlu0 %287, %v258
        %v289 = vpop.permute.xlu0 %288
        %v291 = vperm.slane %v257, 2
        %v292 = vperm.slane %v257, 6
        %v295 = vperm.slane %v291, 2
        %v296 = vperm.slane %v292, 2
        %v297 = vmul.f32 %v289, %v295
        %v298 = vmul.f32 %v289, %v296
        %v299 = vadd.f32 %v285, %v297
        %v300 = vadd.f32 %v286, %v298
        %301 = vset.pattern.permute.xlu0 3
        %302 = vperm.xlu0 %301, %v258
        %v303 = vpop.permute.xlu0 %302
        %v305 = vperm.slane %v257, 3
        %v306 = vperm.slane %v257, 7
        %v309 = vperm.slane %v305, 3
        %v310 = vperm.slane %v306, 3
        %v311 = vmul.f32 %v303, %v309
        %v312 = vmul.f32 %v303, %v310
        %v313 = vadd.f32 %v299, %v311
        %v314 = vadd.f32 %v300, %v312
        %v315 = vld [vmem:[#allocation2] sm:$0xf]
        %vm316 = vcmask 1043456
        %v317 = vsel %vm316, %v313, 0.0
        %v318 = vsel %vm316, %v314, 0.0
        %v319 = vadd.f32 %v317, %v318
        %320 = vadd.xlane.f32.xlu0 %v319
        %v321 = vpop.xlane.xlu0 %320
        %v322 = vadd.f32 %v315, %v321
        %vm323 = vcmask 3072
        %324 = vst.msk [vmem:[#allocation2] sm:$0xf] %vm323, %v322
        %v325 = vld [vmem:[#allocation3] sm:$0xf]
        %v326 = vmul.f32 %v313, %v313
        %v327 = vmul.f32 %v314, %v314
        %v328 = vsel %vm316, %v326, 0.0
        %v329 = vsel %vm316, %v327, 0.0
        %v330 = vadd.f32 %v328, %v329
        %331 = vadd.xlane.f32.xlu0 %v330
        %v332 = vpop.xlane.xlu0 %331
        %v333 = vadd.f32 %v325, %v332
        %334 = vst.msk [vmem:[#allocation3] sm:$0xf] %vm323, %v333
        // Predicated region
        $region45: #{tpu_custom_call.1} parent=35 // pred_check
          _
        $region46: #{tpu_custom_call.1} parent=35 // pred_check_branch
          %336 = sbr.rel (%p250) target = $region48
        $region47: #{tpu_custom_call.1} parent=35 // pred_region
          %v337 = vld [vmem:[#allocation2] sm:$0xf]
          %v338 = vmul.f32 %v337, 0.001953125
          %v339 = vld [vmem:[#allocation3] sm:$0xf]
          %v340 = vmul.f32 %v339, 0.001953125
          %v341 = vmul.f32 %v338, %v338
          %v342 = vsub.f32 %v340, %v341
          %v343 = vmax.f32 %v342, 0.0
          %v344 = vld [vmem:[%s2] sm:$0xf]
          %v345 = vadd.f32 %v343, 1e-05
          %v346 = vrsqrt.pop %v345
          %v347 = vmul.f32 %v346, %v345
          %v348 = vmul.f32 %v347, %v346
          %v349 = vmul.f32 0.5, %v348
          %v350 = vsub.f32 1.5, %v349
          %v351 = vmul.f32 %v346, %v350
          %vm352 = vweird.f32 %v345
          %vm353 = vweird.f32 %v346
          %vm354 = vmor %vm352, %vm353
          %v355 = vsel %vm354, %v346, %v351
          %v356 = vmul.f32 %v344, %v355
          %357 = vst.msk [vmem:[%s4] sm:$0xf] %vm323, %v356
          %v358 = vld [vmem:[%s3] sm:$0xf]
          %v359 = vmul.f32 %v338, %v356
          %v360 = vsub.f32 %v358, %v359
          %361 = vst.msk [vmem:[%s5] sm:$0xf] %vm323, %v360
        $region48: #{tpu_custom_call.1} parent=35 // pred_fallthru
          _
        // Predicated region
        $region49: #{tpu_custom_call.1} parent=35 // pred_check
          %p362 = pneg %p136
        $region50: #{tpu_custom_call.1} parent=35 // pred_check_branch
          %364 = sbr.rel (%p362) target = $region52
        $region51: #{tpu_custom_call.1} parent=35 // pred_region
          _
        $region52: #{tpu_custom_call.1} parent=35 // pred_fallthru
          _
        // Predicated region
        $region53: #{tpu_custom_call.1} parent=35 // pred_check
          %p365 = pneg %p157
        $region54: #{tpu_custom_call.1} parent=35 // pred_check_branch
          %367 = sbr.rel (%p365) target = $region56
        $region55: #{tpu_custom_call.1} parent=35 // pred_region
          _
        $region56: #{tpu_custom_call.1} parent=35 // pred_fallthru
          _
        // Predicated region
        $region57: #{tpu_custom_call.1} parent=35 // pred_check
          %p368 = pneg %p136
        $region58: #{tpu_custom_call.1} parent=35 // pred_check_branch
          %370 = sbr.rel (%p368) target = $region60
        $region59: #{tpu_custom_call.1} parent=35 // pred_region
          _
        $region60: #{tpu_custom_call.1} parent=35 // pred_fallthru
          _
        // Predicated region
        $region61: #{tpu_custom_call.1} parent=35 // pred_check
          %p371 = pneg %p157
        $region62: #{tpu_custom_call.1} parent=35 // pred_check_branch
          %373 = sbr.rel (%p371) target = $region64
        $region63: #{tpu_custom_call.1} parent=35 // pred_region
          _
        $region64: #{tpu_custom_call.1} parent=35 // pred_fallthru
          _
      $region36: #{tpu_custom_call.1} parent=5 // pred_fallthru
        _
      %p374 = scmp.le.s32.totalorder 2, %s15
      // Predicated region
      $region65: #{tpu_custom_call.1} parent=5 // pred_check
        %p375 = pneg %p374
      $region66: #{tpu_custom_call.1} parent=5 // pred_check_branch
        %377 = sbr.rel (%p375) target = $region68
      $region67: #{tpu_custom_call.1} parent=5 // pred_region
        %s378 = ssub.s32 %s15, 2
      $region68: #{tpu_custom_call.1} parent=5 // pred_fallthru
        _
    $region6: #{tpu_custom_call.1} parent=1 // loop_footer
      %s19 = sadd.s32 1, %s15
    $region7: #{tpu_custom_call.1} parent=1 // loop_footer_branch
      %14 = sbr.rel target = $region3
    $region8: #{tpu_custom_call.1} parent=1 // loop_exit
      _
    %379 = vsyncpa [#allocation5], 1
    %s380 = scalar_lea.sflag [#allocation5], 1
    %381 = vsyncpa %s380, 1

</llo_original>
